<compile_context>
chip_gen: v6e
topology: v6e:2x2x1
jax: 0.10.0
libtpu: 0.0.40
codegen_flags: <defaults>
</compile_context>

<pallas_src>
import functools

import numpy as np

import jax
import jax.numpy as jnp
from jax import lax
from jax.experimental import pallas as pl
from jax.experimental.pallas import tpu as pltpu

EPS = 1e-5  # BatchNorm2d default eps


# ----------------------------------------------------------------------------
# Pallas kernel: entire conv stem for one image per grid step
# ----------------------------------------------------------------------------
def _stem_kernel(*refs, layer_dims, W1, SMAX, PAD, ND):
    """refs = (x, [w_cat, bias] per conv layer, proj_w, proj_b, out, abuf).

    Activations live in a flattened superpixel layout: row g = i*W1 + j
    (i in [0,Hs], j in [0,W1)) holds superpixel (i-1, j-1); i==0 / j==0 rows
    are the conv zero padding.  The input block carries SMAX zero "history"
    rows on top; the scratch abuf keeps PAD zero history rows, so a tap shift
    `s` is just the static slice [PAD - s : PAD - s + ND].
    """
    nconv = len(layer_dims)
    x_ref = refs[0]
    conv_refs = refs[1:1 + 2 * nconv]
    pw_ref, pb_ref = refs[1 + 2 * nconv], refs[2 + 2 * nconv]
    out_ref = refs[3 + 2 * nconv]
    abuf = refs[4 + 2 * nconv]

    # tap order t = dh*2 + dw for (dh, dw) in {0,1}^2; shift = (1-dh)*W1 + (1-dw)
    shifts = (W1 + 1, W1, 1, 0)

    # Zero the shift-history rows (tiny); the data region [PAD, PAD+ND) is fully
    # overwritten each layer so these stay zero.
    abuf[0:PAD, :] = jnp.zeros((PAD, abuf.shape[1]), abuf.dtype)

    # Superpixel pad-row mask built in-kernel (no lane-padded (ND,1) buffer):
    # row g = i*W1 + j  ->  valid iff i > 0 and j > 0.
    valid = None
    if nconv > 1:
        g = lax.broadcasted_iota(jnp.int32, (ND, 1), 0)
        valid = jnp.logical_and(g >= W1, g % W1 != 0)

    act = None  # bf16 output of the last conv layer, kept as a value
    for li, (cin, cout) in enumerate(layer_dims):
        w_ref = conv_refs[2 * li]       # (4*cin, cout) bf16, BN scale folded in
        b_ref = conv_refs[2 * li + 1]   # (1, cout) f32 folded BN bias

        # One fused-K matmul per layer: concat the 4 shifted tap slices along
        # lanes (K = 4*cin), single bf16 cast, single MXU dot.
        if li == 0:
            taps = [x_ref[0, SMAX - s:SMAX - s + ND, :] for s in shifts]
        else:
            taps = [abuf[PAD - s:PAD - s + ND, 0:cin] for s in shifts]
        a_cat = jnp.concatenate(taps, axis=-1).astype(jnp.bfloat16)   # (ND, 4*cin)
        acc = jnp.dot(a_cat, w_ref[...], preferred_element_type=jnp.float32)
        out = jnp.maximum(acc + b_ref[...], 0.0)                      # BN bias + ReLU

        if li < nconv - 1:
            # Re-zero the superpixel pad rows so the next layer's taps read zeros.
            out = jnp.where(valid, out, 0.0)
            abuf[PAD:PAD + ND, 0:cout] = out.astype(abuf.dtype)
        else:
            # Last conv layer: pad rows are stripped in the wrapper, so no mask
            # and no VMEM round trip.
            act = out.astype(jnp.bfloat16)

    # Final 1x1 projection written straight to the padded output slab (one store).
    proj = jnp.dot(act, pw_ref[...], preferred_element_type=jnp.float32) + pb_ref[...]
    out_ref[0, :, :] = proj.astype(out_ref.dtype)


# ----------------------------------------------------------------------------
# Wrapper-side weight rearrangement (superpixel formulation)
# ----------------------------------------------------------------------------
def _superpixel_conv_weight(w_oihw, b_in):
    """Rearrange a 3x3 / stride 2 / pad 1 conv weight into 4 tap matrices.

    Input "fat" channel index  = (p*b_in + q)*Cin  + ci   (p,q: pixel in superpixel)
    Output "fat" channel index = (p'*h   + q')*Cout + co  with h = b_in // 2.
    Tap index t = dh*2 + dw, (dh,dw) in {0,1}^2 (0 = neighbour above/left).
    """
    w = np.asarray(w_oihw, np.float32)
    cout, cin, KH, KW = w.shape
    h = b_in // 2
    taps = np.zeros((4, b_in * b_in * cin, h * h * cout), np.float32)
    for p_ in range(h):
        for q_ in range(h):
            for kh in range(KH):
                for kw in range(KW):
                    u, v = 2 * p_ + kh - 1, 2 * q_ + kw - 1
                    dh, p = (1, u) if u >= 0 else (0, b_in - 1)
                    dw, q = (1, v) if v >= 0 else (0, b_in - 1)
                    t = dh * 2 + dw
                    ri = (p * b_in + q) * cin
                    ro = (p_ * h + q_) * cout
                    taps[t, ri:ri + cin, ro:ro + cout] += w[:, :, kh, kw].T
    return taps


# ----------------------------------------------------------------------------
# Parameters (deterministic, in-script) — mirrors ImgConvStemBackbone.__init__
# ----------------------------------------------------------------------------
def _conv_bn_params(key, cin, cout, k):
    kw_, kg, kb, km, kv = jax.random.split(key, 5)
    return dict(
        w=jax.random.normal(kw_, (cout, cin, k, k), jnp.float32) * 0.1,
        gamma=jax.random.uniform(kg, (cout,), jnp.float32, 0.5, 1.5),
        beta=jax.random.normal(kb, (cout,), jnp.float32) * 0.1,
        mean=jax.random.normal(km, (cout,), jnp.float32) * 0.1,
        var=jax.random.uniform(kv, (cout,), jnp.float32, 0.5, 1.5),
    )


def build_params(key, d_model, downsample_factor, output_channels, kernel_size):
    assert downsample_factor % 2 == 0
    assert output_channels % (downsample_factor // 2) == 0
    input_channels = output_channels // (downsample_factor // 2)

    layers = []
    key, sub = jax.random.split(key)
    layers.append(_conv_bn_params(sub, 3, input_channels, kernel_size))
    while input_channels != output_channels:
        key, sub = jax.random.split(key)
        layers.append(_conv_bn_params(sub, input_channels, input_channels * 2, kernel_size))
        input_channels *= 2

    key, kw_, kb = jax.random.split(key, 3)
    proj_w = jax.random.normal(kw_, (d_model, output_channels, 1, 1), jnp.float32) * 0.1
    proj_b = jax.random.normal(kb, (d_model,), jnp.float32) * 0.1
    return dict(layers=layers, proj_w=proj_w, proj_b=proj_b,
                kernel_size=kernel_size, d_model=d_model)


# ----------------------------------------------------------------------------
# Forward pass (Pallas version)
# ----------------------------------------------------------------------------
def img_conv_stem_forward(x_nchw, params):
    k = params["kernel_size"]
    assert k == 3, "fused superpixel path assumes kernel_size=3 blocks"
    d_model = params["d_model"]
    layers = params["layers"]
    nconv = len(layers)
    DF = 2 ** nconv                      # total downsample factor
    B, Cimg, H, W = x_nchw.shape
    assert H % DF == 0 and W % DF == 0, "H/W must be divisible by the downsample factor"

    Hs, Ws = H // DF, W // DF            # final (superpixel) grid
    W1 = Ws + 1                          # padded superpixel width
    ND = (Hs + 1) * W1                   # padded, flattened superpixel rows
    SMAX = W1 + 1                        # largest tap shift
    PAD = -(-SMAX // 8) * 8              # history rows, rounded to a sublane multiple
    C0 = DF * DF * Cimg                  # fat channels of the space-to-depth'd input

    # ---- wrapper-side layout prep: space-to-depth + superpixel/shift padding ----
    x = jnp.transpose(x_nchw, (0, 2, 3, 1))                           # NCHW -> NHWC
    x = x.reshape(B, Hs, DF, Ws, DF, Cimg)
    x = jnp.transpose(x, (0, 1, 3, 2, 4, 5)).reshape(B, Hs, Ws, C0)   # fat channels
    x = jnp.pad(x, ((0, 0), (1, 0), (1, 0), (0, 0)))                  # top/left zero pad
    x = x.reshape(B, ND, C0)
    x_sp = jnp.pad(x, ((0, 0), (SMAX, 0), (0, 0)))                    # shift-history rows

    # ---- fold BN into the fused (4*cin, cout) tap weights (done once, on host) ----
    layer_dims = []
    conv_inputs = []
    b_in, cin = DF, Cimg
    for p in layers:
        cout = int(p["w"].shape[0])
        scale = np.asarray(p["gamma"]) / np.sqrt(np.asarray(p["var"]) + EPS)
        bias = np.asarray(p["beta"]) - np.asarray(p["mean"]) * scale
        h = b_in // 2
        fat_cin, fat_cout = b_in * b_in * cin, h * h * cout
        w4 = _superpixel_conv_weight(p["w"], b_in) * np.tile(scale, h * h)[None, None, :]
        w_cat = w4.reshape(4 * fat_cin, fat_cout)        # tap-major rows == concat order
        bias_f = np.tile(bias, h * h).reshape(1, -1).astype(np.float32)
        layer_dims.append((fat_cin, fat_cout))
        conv_inputs += [jnp.asarray(w_cat, jnp.bfloat16), jnp.asarray(bias_f)]
        b_in, cin = h, cout
    assert b_in == 1  # after the last stride-2 layer one superpixel == one output pixel
    for (_, co), (ci_next, _) in zip(layer_dims[:-1], layer_dims[1:]):
        assert co == ci_next  # each layer reads exactly the previous layer's columns

    wp = np.asarray(params["proj_w"], np.float32)[:, :, 0, 0].T       # (OC, d_model)
    proj_inputs = [jnp.asarray(wp, jnp.bfloat16),
                   jnp.asarray(np.asarray(params["proj_b"], np.float32).reshape(1, -1))]

    # abuf only holds the intermediate conv outputs (inputs to layers 1..nconv-1)
    cmax_mid = max([co for _, co in layer_dims[:-1]] + [8])

    inputs = [x_sp] + conv_inputs + proj_inputs
    in_specs = [pl.BlockSpec((1, SMAX + ND, C0), lambda b: (b, 0, 0))]
    for a in conv_inputs + proj_inputs:
        in_specs.append(pl.BlockSpec(a.shape, lambda b, _nd=a.ndim: (0,) * _nd))

    flops = 0
    for ci, co in layer_dims:
        flops += 2 * B * ND * (4 * ci) * co
    flops += 2 * B * ND * layer_dims[-1][1] * d_model
    bytes_accessed = sum(int(np.prod(a.shape)) * a.dtype.itemsize for a in inputs)
    bytes_accessed += B * ND * d_model * 4

    # Generation-aware VMEM headroom: ~75% of physical (96 MiB on v5e/v6e's
    # 128 MiB, 48 MiB on v7x's 64 MiB), never below 32 MiB, capped at 100 MiB.
    try:
        vmem_cap = int(pltpu.get_tpu_info().vmem_capacity_bytes)
    except Exception:
        vmem_cap = 64 * 1024 * 1024
    vmem_limit = max(32 * 1024 * 1024, min(vmem_cap * 3 // 4, 100 * 1024 * 1024))

    kernel = functools.partial(_stem_kernel, layer_dims=tuple(layer_dims),
                               W1=W1, SMAX=SMAX, PAD=PAD, ND=ND)

    out = pl.pallas_call(
        kernel,
        out_shape=jax.ShapeDtypeStruct((B, ND, d_model), jnp.float32),
        grid=(B,),
        in_specs=in_specs,
        out_specs=pl.BlockSpec((1, ND, d_model), lambda b: (b, 0, 0)),
        scratch_shapes=[pltpu.VMEM((PAD + ND, cmax_mid), jnp.float32)],
        compiler_params=pltpu.CompilerParams(
            dimension_semantics=("parallel",),      # v7x megacore: shard batch
            vmem_limit_bytes=vmem_limit),
        cost_estimate=pl.CostEstimate(flops=flops, transcendentals=0,
                                      bytes_accessed=bytes_accessed),
    )(*inputs)

    # Strip the superpixel padding (cheap XLA slice) and flatten:
    # (B, Hs, Ws, d) -> (B, Hs*Ws, d) == PyTorch flatten(-2).transpose(1, 2).
    out = out.reshape(B, Hs + 1, W1, d_model)[:, 1:, 1:, :]
    return out.reshape(B, Hs * Ws, d_model)


# ----------------------------------------------------------------------------
# Pure-JAX reference (lax.conv, f32) for the correctness check
# ----------------------------------------------------------------------------
def ref_forward(x_nchw, params):
    x = x_nchw
    for p in params["layers"]:
        x = lax.conv_general_dilated(
            x, p["w"], window_strides=(2, 2), padding=((1, 1), (1, 1)),
            dimension_numbers=("NCHW", "OIHW", "NCHW"),
            precision=lax.Precision.HIGHEST)
        scale = (p["gamma"] / jnp.sqrt(p["var"] + EPS))[None, :, None, None]
        bias = (p["beta"] - p["mean"] * p["gamma"] / jnp.sqrt(p["var"] + EPS))[None, :, None, None]
        x = jnp.maximum(x * scale + bias, 0.0)
    x = lax.conv_general_dilated(
        x, params["proj_w"], window_strides=(1, 1), padding=((0, 0), (0, 0)),
        dimension_numbers=("NCHW", "OIHW", "NCHW"),
        precision=lax.Precision.HIGHEST)
    x = x + params["proj_b"][None, :, None, None]
    B, D, H, W = x.shape
    return jnp.transpose(x.reshape(B, D, H * W), (0, 2, 1))


# ----------------------------------------------------------------------------
if __name__ == "__main__":
    # module config: d_model=32, downsample_factor=4, output_channels=8, kernel=3
    d_model, downsample_factor, output_channels, kernel_size = 32, 4, 8, 3
    B, H, W = 2, 16, 16

    key = jax.random.PRNGKey(0)
    kparams, kx = jax.random.split(key)
    params = build_params(kparams, d_model, downsample_factor, output_channels, kernel_size)
    x = jax.random.normal(kx, (B, 3, H, W), jnp.float32)  # NCHW like PyTorch

    out = jax.block_until_ready(img_conv_stem_forward(x, params))

    expected_seq = (H // downsample_factor) * (W // downsample_factor)
    assert out.shape == (B, expected_seq, d_model), out.shape

    ref = jax.block_until_ready(ref_forward(x, params))
    max_err = float(jnp.max(jnp.abs(out - ref)))
    # bf16 matmul operands with f32 accumulation -> ~1e-3..1e-2 abs error budget.
    assert jnp.allclose(out, ref, rtol=2e-2, atol=2e-2), max_err

    print("KERNEL_OK")
</pallas_src>

<mosaic_0001>
module attributes {stable_mosaic.version = 11 : i64} {
  func.func @_stem_kernel(%arg0: i32, %arg1: memref<1x31x48xf32, #tpu.memory_space<vmem>>, %arg2: memref<192x16xbf16, #tpu.memory_space<vmem>>, %arg3: memref<1x16xf32, #tpu.memory_space<vmem>>, %arg4: memref<64x8xbf16, #tpu.memory_space<vmem>>, %arg5: memref<1x8xf32, #tpu.memory_space<vmem>>, %arg6: memref<8x32xbf16, #tpu.memory_space<vmem>>, %arg7: memref<1x32xf32, #tpu.memory_space<vmem>>, %arg8: memref<1x25x32xf32, #tpu.memory_space<vmem>>, %arg9: memref<33x16xf32, #tpu.memory_space<vmem>>) attributes {dimension_semantics = [#tpu.dimension_semantics<parallel>], iteration_bounds = array<i64: 2>, scalar_prefetch = 0 : i64, scratch_operands = 1 : i64, tpu.core_type = #tpu.core_type<tc>, window_params = [{transform_indices = @transform_0, window_bounds = array<i64: 1, 31, 48>}, {pipeline_mode = #tpu.pipeline_mode<synchronous>, transform_indices = @transform_1, window_bounds = array<i64: 192, 16>}, {pipeline_mode = #tpu.pipeline_mode<synchronous>, transform_indices = @transform_2, window_bounds = array<i64: 1, 16>}, {pipeline_mode = #tpu.pipeline_mode<synchronous>, transform_indices = @transform_3, window_bounds = array<i64: 64, 8>}, {pipeline_mode = #tpu.pipeline_mode<synchronous>, transform_indices = @transform_4, window_bounds = array<i64: 1, 8>}, {pipeline_mode = #tpu.pipeline_mode<synchronous>, transform_indices = @transform_5, window_bounds = array<i64: 8, 32>}, {pipeline_mode = #tpu.pipeline_mode<synchronous>, transform_indices = @transform_6, window_bounds = array<i64: 1, 32>}, {transform_indices = @transform_7, window_bounds = array<i64: 1, 25, 32>}]} {
    %cst = arith.constant 0.000000e+00 : f32
    %0 = vector.broadcast %cst : f32 to vector<8x16xf32>
    %c0 = arith.constant 0 : index
    %c0_0 = arith.constant 0 : index
    %1 = vector.load %arg9[%c0, %c0_0] : memref<33x16xf32, #tpu.memory_space<vmem>>, vector<8x16xf32>
    tpu.vector_store %arg9[%c0, %c0_0], %0 {strides = array<i32>} : memref<33x16xf32, #tpu.memory_space<vmem>>, vector<8x16xf32>,
    %2 = tpu.iota {dimensions = array<i32: 0>} : vector<25x1xi32>
    %c5_i32 = arith.constant 5 : i32
    %3 = vector.broadcast %c5_i32 : i32 to vector<25x1xi32>
    %4 = arith.cmpi sge, %2, %3 : vector<25x1xi32>
    %c5_i32_1 = arith.constant 5 : i32
    %c0_i32 = arith.constant 0 : i32
    %5 = arith.cmpi eq, %c5_i32_1, %c0_i32 : i32
    %c1_i32 = arith.constant 1 : i32
    %6 = arith.select %5, %c1_i32, %c5_i32_1 : i32
    %7 = vector.broadcast %6 : i32 to vector<25x1xi32>
    %8 = arith.remsi %2, %7 : vector<25x1xi32>
    %c0_i32_2 = arith.constant 0 : i32
    %9 = vector.broadcast %c0_i32_2 : i32 to vector<25x1xi32>
    %10 = arith.cmpi ne, %8, %9 : vector<25x1xi32>
    %c0_i32_3 = arith.constant 0 : i32
    %11 = vector.broadcast %c0_i32_3 : i32 to vector<25x1xi32>
    %12 = arith.cmpi slt, %8, %11 : vector<25x1xi32>
    %c0_i32_4 = arith.constant 0 : i32
    %13 = arith.cmpi slt, %6, %c0_i32_4 : i32
    %14 = vector.broadcast %13 : i1 to vector<25x1xi1>
    %15 = vector.broadcast %14 : vector<25x1xi1> to vector<25x1xi1>
    %16 = arith.xori %12, %15 : vector<25x1xi1>
    %17 = arith.andi %16, %10 : vector<25x1xi1>
    %18 = vector.broadcast %6 : i32 to vector<25x1xi32>
    %19 = arith.addi %8, %18 : vector<25x1xi32>
    %20 = arith.select %17, %19, %8 : vector<25x1xi1>, vector<25x1xi32>
    %c0_i32_5 = arith.constant 0 : i32
    %21 = vector.broadcast %c0_i32_5 : i32 to vector<25x1xi32>
    %22 = arith.cmpi ne, %20, %21 : vector<25x1xi32>
    %23 = arith.andi %4, %22 : vector<25x1xi1>
    %c0_6 = arith.constant 0 : index
    %c0_7 = arith.constant 0 : index
    %c0_8 = arith.constant 0 : index
    %24 = vector.load %arg1[%c0_6, %c0_7, %c0_8] : memref<1x31x48xf32, #tpu.memory_space<vmem>>, vector<1x25x48xf32>
    %25 = vector.shape_cast %24 : vector<1x25x48xf32> to vector<25x48xf32>
    %c0_9 = arith.constant 0 : index
    %c1 = arith.constant 1 : index
    %c0_10 = arith.constant 0 : index
    %26 = vector.load %arg1[%c0_9, %c1, %c0_10] : memref<1x31x48xf32, #tpu.memory_space<vmem>>, vector<1x25x48xf32>
    %27 = vector.shape_cast %26 : vector<1x25x48xf32> to vector<25x48xf32>
    %c0_11 = arith.constant 0 : index
    %c5 = arith.constant 5 : index
    %c0_12 = arith.constant 0 : index
    %28 = vector.load %arg1[%c0_11, %c5, %c0_12] : memref<1x31x48xf32, #tpu.memory_space<vmem>>, vector<1x25x48xf32>
    %29 = vector.shape_cast %28 : vector<1x25x48xf32> to vector<25x48xf32>
    %c0_13 = arith.constant 0 : index
    %c6 = arith.constant 6 : index
    %c0_14 = arith.constant 0 : index
    %30 = vector.load %arg1[%c0_13, %c6, %c0_14] : memref<1x31x48xf32, #tpu.memory_space<vmem>>, vector<1x25x48xf32>
    %31 = vector.shape_cast %30 : vector<1x25x48xf32> to vector<25x48xf32>
    %32 = tpu.concatenate %25, %27, %29, %31 in 1 : vector<25x48xf32>, vector<25x48xf32>, vector<25x48xf32>, vector<25x48xf32> -> vector<25x192xf32>
    %33 = arith.truncf %32 : vector<25x192xf32> to vector<25x192xbf16>
    %c0_15 = arith.constant 0 : index
    %c0_16 = arith.constant 0 : index
    %34 = vector.load %arg2[%c0_15, %c0_16] : memref<192x16xbf16, #tpu.memory_space<vmem>>, vector<192x16xbf16>
    %cst_17 = arith.constant dense<0.000000e+00> : vector<25x16xf32>
    %35 = tpu.matmul %33, %34, %cst_17 {dimension_numbers = #tpu.dot_dimension_numbers<[1], [0], [0], [1], [0, 0, 1, 1], [], []>} : vector<25x192xbf16>, vector<192x16xbf16>, vector<25x16xf32> -> vector<25x16xf32>
    %c0_18 = arith.constant 0 : index
    %c0_19 = arith.constant 0 : index
    %36 = vector.load %arg3[%c0_18, %c0_19] : memref<1x16xf32, #tpu.memory_space<vmem>>, vector<1x16xf32>
    %37 = vector.broadcast %36 : vector<1x16xf32> to vector<25x16xf32>
    %38 = arith.addf %35, %37 : vector<25x16xf32>
    %cst_20 = arith.constant 0.000000e+00 : f32
    %39 = vector.broadcast %cst_20 : f32 to vector<25x16xf32>
    %40 = arith.maximumf %38, %39 : vector<25x16xf32>
    %cst_21 = arith.constant 0.000000e+00 : f32
    %41 = vector.shape_cast %23 : vector<25x1xi1> to vector<25x1xi1>
    %42 = vector.broadcast %41 : vector<25x1xi1> to vector<25x16xi1>
    %43 = vector.broadcast %cst_21 : f32 to vector<25x16xf32>
    %44 = arith.select %42, %40, %43 : vector<25x16xi1>, vector<25x16xf32>
    %c8 = arith.constant 8 : index
    %c0_22 = arith.constant 0 : index
    %45 = vector.load %arg9[%c8, %c0_22] : memref<33x16xf32, #tpu.memory_space<vmem>>, vector<25x16xf32>
    tpu.vector_store %arg9[%c8, %c0_22], %44 {strides = array<i32>} : memref<33x16xf32, #tpu.memory_space<vmem>>, vector<25x16xf32>,
    %c2 = arith.constant 2 : index
    %c0_23 = arith.constant 0 : index
    %46 = vector.load %arg9[%c2, %c0_23] : memref<33x16xf32, #tpu.memory_space<vmem>>, vector<25x16xf32>
    %c3 = arith.constant 3 : index
    %c0_24 = arith.constant 0 : index
    %47 = vector.load %arg9[%c3, %c0_24] : memref<33x16xf32, #tpu.memory_space<vmem>>, vector<25x16xf32>
    %c7 = arith.constant 7 : index
    %c0_25 = arith.constant 0 : index
    %48 = vector.load %arg9[%c7, %c0_25] : memref<33x16xf32, #tpu.memory_space<vmem>>, vector<25x16xf32>
    %c8_26 = arith.constant 8 : index
    %c0_27 = arith.constant 0 : index
    %49 = vector.load %arg9[%c8_26, %c0_27] : memref<33x16xf32, #tpu.memory_space<vmem>>, vector<25x16xf32>
    %50 = tpu.concatenate %46, %47, %48, %49 in 1 : vector<25x16xf32>, vector<25x16xf32>, vector<25x16xf32>, vector<25x16xf32> -> vector<25x64xf32>
    %51 = arith.truncf %50 : vector<25x64xf32> to vector<25x64xbf16>
    %c0_28 = arith.constant 0 : index
    %c0_29 = arith.constant 0 : index
    %52 = vector.load %arg4[%c0_28, %c0_29] : memref<64x8xbf16, #tpu.memory_space<vmem>>, vector<64x8xbf16>
    %cst_30 = arith.constant dense<0.000000e+00> : vector<25x8xf32>
    %53 = tpu.matmul %51, %52, %cst_30 {dimension_numbers = #tpu.dot_dimension_numbers<[1], [0], [0], [1], [0, 0, 1, 1], [], []>} : vector<25x64xbf16>, vector<64x8xbf16>, vector<25x8xf32> -> vector<25x8xf32>
    %c0_31 = arith.constant 0 : index
    %c0_32 = arith.constant 0 : index
    %54 = vector.load %arg5[%c0_31, %c0_32] : memref<1x8xf32, #tpu.memory_space<vmem>>, vector<1x8xf32>
    %55 = vector.broadcast %54 : vector<1x8xf32> to vector<25x8xf32>
    %56 = arith.addf %53, %55 : vector<25x8xf32>
    %cst_33 = arith.constant 0.000000e+00 : f32
    %57 = vector.broadcast %cst_33 : f32 to vector<25x8xf32>
    %58 = arith.maximumf %56, %57 : vector<25x8xf32>
    %59 = arith.truncf %58 : vector<25x8xf32> to vector<25x8xbf16>
    %c0_34 = arith.constant 0 : index
    %c0_35 = arith.constant 0 : index
    %60 = vector.load %arg6[%c0_34, %c0_35] : memref<8x32xbf16, #tpu.memory_space<vmem>>, vector<8x32xbf16>
    %cst_36 = arith.constant dense<0.000000e+00> : vector<25x32xf32>
    %61 = tpu.matmul %59, %60, %cst_36 {dimension_numbers = #tpu.dot_dimension_numbers<[1], [0], [0], [1], [0, 0, 1, 1], [], []>} : vector<25x8xbf16>, vector<8x32xbf16>, vector<25x32xf32> -> vector<25x32xf32>
    %c0_37 = arith.constant 0 : index
    %c0_38 = arith.constant 0 : index
    %62 = vector.load %arg7[%c0_37, %c0_38] : memref<1x32xf32, #tpu.memory_space<vmem>>, vector<1x32xf32>
    %63 = vector.broadcast %62 : vector<1x32xf32> to vector<25x32xf32>
    %64 = arith.addf %61, %63 : vector<25x32xf32>
    %c0_39 = arith.constant 0 : index
    %c0_40 = arith.constant 0 : index
    %c0_41 = arith.constant 0 : index
    %65 = vector.load %arg8[%c0_39, %c0_40, %c0_41] : memref<1x25x32xf32, #tpu.memory_space<vmem>>, vector<1x25x32xf32>
    %66 = vector.shape_cast %65 : vector<1x25x32xf32> to vector<25x32xf32>
    %67 = vector.shape_cast %64 : vector<25x32xf32> to vector<1x25x32xf32>
    tpu.vector_store %arg8[%c0_39, %c0_40, %c0_41], %67 {strides = array<i32>} : memref<1x25x32xf32, #tpu.memory_space<vmem>>, vector<1x25x32xf32>,
    return
  }
  func.func @transform_0(%arg0: i32) -> (i32, i32, i32) {
    %c0_i32 = arith.constant 0 : i32
    %c0_i32_0 = arith.constant 0 : i32
    %c0_i32_1 = arith.constant 0 : i32
    return %arg0, %c0_i32, %c0_i32_0 : i32, i32, i32
  }
  func.func @transform_1(%arg0: i32) -> (i32, i32) {
    %c0_i32 = arith.constant 0 : i32
    %c0_i32_0 = arith.constant 0 : i32
    %c0_i32_1 = arith.constant 0 : i32
    return %c0_i32, %c0_i32_0 : i32, i32
  }
  func.func @transform_2(%arg0: i32) -> (i32, i32) {
    %c0_i32 = arith.constant 0 : i32
    %c0_i32_0 = arith.constant 0 : i32
    %c0_i32_1 = arith.constant 0 : i32
    return %c0_i32, %c0_i32_0 : i32, i32
  }
  func.func @transform_3(%arg0: i32) -> (i32, i32) {
    %c0_i32 = arith.constant 0 : i32
    %c0_i32_0 = arith.constant 0 : i32
    %c0_i32_1 = arith.constant 0 : i32
    return %c0_i32, %c0_i32_0 : i32, i32
  }
  func.func @transform_4(%arg0: i32) -> (i32, i32) {
    %c0_i32 = arith.constant 0 : i32
    %c0_i32_0 = arith.constant 0 : i32
    %c0_i32_1 = arith.constant 0 : i32
    return %c0_i32, %c0_i32_0 : i32, i32
  }
  func.func @transform_5(%arg0: i32) -> (i32, i32) {
    %c0_i32 = arith.constant 0 : i32
    %c0_i32_0 = arith.constant 0 : i32
    %c0_i32_1 = arith.constant 0 : i32
    return %c0_i32, %c0_i32_0 : i32, i32
  }
  func.func @transform_6(%arg0: i32) -> (i32, i32) {
    %c0_i32 = arith.constant 0 : i32
    %c0_i32_0 = arith.constant 0 : i32
    %c0_i32_1 = arith.constant 0 : i32
    return %c0_i32, %c0_i32_0 : i32, i32
  }
  func.func @transform_7(%arg0: i32) -> (i32, i32, i32) {
    %c0_i32 = arith.constant 0 : i32
    %c0_i32_0 = arith.constant 0 : i32
    %c0_i32_1 = arith.constant 0 : i32
    return %arg0, %c0_i32, %c0_i32_0 : i32, i32, i32
  }
}

</mosaic_0001>

<llo_original>
// kernel: tpu_custom_call.1
$region0: #{tpu_custom_call.1}
  #allocation0 [shape = 'u32[]', space=smem, size = 0x4, offset = 0x4, fixed_abs, tag = 'smem constant byte address 0x4 - core index']
  #allocation1 [shape = 'u32[144,128]{1,0:T(1,128)}', space=vmem, size = 0x12000, scoped, tag = 'internal scratch']
  #allocation2 [shape = 'f32[33,16]{1,0:T(8,128)}', space=vmem, size = 0x5000, scoped, tag = 'scratch operand']
  %s0 = inlined_call_operand.vmem [shape: f32[2,31,48], index: 0, kind: input, shape index: {}]
  %s1 = inlined_call_operand.vmem [shape: bf16[192,16], index: 1, kind: input, shape index: {}]
  %s2 = inlined_call_operand.vmem [shape: f32[1,16], index: 2, kind: input, shape index: {}]
  %s3 = inlined_call_operand.vmem [shape: bf16[64,8], index: 3, kind: input, shape index: {}]
  %s4 = inlined_call_operand.vmem [shape: f32[1,8], index: 4, kind: input, shape index: {}]
  %s5 = inlined_call_operand.vmem [shape: bf16[8,32], index: 5, kind: input, shape index: {}]
  %s6 = inlined_call_operand.vmem [shape: f32[1,32], index: 6, kind: input, shape index: {}]
  %s7 = inlined_call_operand.vmem [shape: f32[2,25,32], index: 7, kind: output, shape index: {}]
  %s8 = sld [smem:[#allocation0]]
  $region61: #{tpu_custom_call.1} parent=0
    _
  %s10 = ssub.s32 1, %s8
  %s11 = scalar_select 0, %s10, %s8
  loop: start=0, step=1, limit=4
  $region2: #{tpu_custom_call.1} parent=0 // loop_pre_header
    _
  $region3: #{tpu_custom_call.1} parent=0 // loop_header
    %s13 = sphi 0, %s17
    %p14 = scmp.ge.s32.totalorder %s13, 4
    %s23 = sphi 0, %s25
    %s26 = sphi 0, %s23
    %s27 = sphi 0, %s26
    %s43 = sphi 0, %s27
    %s47 = sphi 0, %s47
    %s49 = sphi 0, %s47
    %s50 = sphi 0, %s49
    %s64 = sphi 0, %s50
    %s68 = sphi 0, %s68
    %s70 = sphi 0, %s68
    %s71 = sphi 0, %s70
    %s85 = sphi 0, %s71
    %s89 = sphi 0, %s89
    %s91 = sphi 0, %s89
    %s92 = sphi 0, %s91
    %s106 = sphi 0, %s92
    %s110 = sphi 0, %s110
    %s112 = sphi 0, %s110
    %s113 = sphi 0, %s112
    %s127 = sphi 0, %s113
    %s131 = sphi 0, %s131
    %s133 = sphi 0, %s131
    %s134 = sphi 0, %s133
    %s148 = sphi 0, %s134
    %s152 = sphi 0, %s152
    %s154 = sphi 0, %s152
    %s155 = sphi 0, %s154
    %s169 = sphi 0, %s155
    %s175 = sphi 0, %s177
    %s178 = sphi 0, %s175
    %s179 = sphi 0, %s178
    %s195 = sphi 0, %s179
  $region4: #{tpu_custom_call.1} parent=0 // loop_header_branch
    %16 = sbr.rel (%p14) target = $region8
  $region5: #{tpu_custom_call.1} parent=0 // loop_body
    %s18 = ssub.s32 %s13, 1
    %s19 = ssub.s32 %s13, 2
    %s20 = sadd.s32 %s13, 1
    %s21 = ssub.s32 %s13, %s20
    %p22 = scmp.eq.s32.totalorder %s21, 0
    %s24 = sadd.s32 %s23, 1
    %s25 = scalar_select %p22, %s23, %s24
    %p28 = pneg %p22
    %p29 = scmp.eq.s32.totalorder %s13, 1
    %p30 = por %p28, %p29
    %p31 = scmp.ne.s32.totalorder %s23, %s26
    %p32 = scmp.eq.s32.totalorder %s13, 0
    %p33 = por %p31, %p32
    %p34 = scmp.ne.s32.totalorder %s23, %s26
    %p35 = scmp.eq.s32.totalorder %s18, 1
    %p36 = por %p34, %p35
    %p37 = scmp.ne.s32.totalorder %s26, %s27
    %p38 = scmp.eq.s32.totalorder %s18, 0
    %p39 = por %p37, %p38
    %p40 = scmp.ne.s32.totalorder %s26, %s27
    %p41 = scmp.eq.s32.totalorder %s19, 1
    %p42 = por %p40, %p41
    %p44 = scmp.ne.s32.totalorder %s27, %s43
    %p45 = scmp.eq.s32.totalorder %s19, 0
    %p46 = por %p44, %p45
    %s48 = sadd.s32 %s47, 1
    %p51 = scmp.eq.s32.totalorder %s13, 1
    %p52 = scmp.ne.s32.totalorder %s47, %s49
    %p53 = scmp.eq.s32.totalorder %s13, 0
    %p54 = por %p52, %p53
    %p55 = scmp.ne.s32.totalorder %s47, %s49
    %p56 = scmp.eq.s32.totalorder %s18, 1
    %p57 = por %p55, %p56
    %p58 = scmp.ne.s32.totalorder %s49, %s50
    %p59 = scmp.eq.s32.totalorder %s18, 0
    %p60 = por %p58, %p59
    %p61 = scmp.ne.s32.totalorder %s49, %s50
    %p62 = scmp.eq.s32.totalorder %s19, 1
    %p63 = por %p61, %p62
    %p65 = scmp.ne.s32.totalorder %s50, %s64
    %p66 = scmp.eq.s32.totalorder %s19, 0
    %p67 = por %p65, %p66
    %s69 = sadd.s32 %s68, 1
    %p72 = scmp.eq.s32.totalorder %s13, 1
    %p73 = scmp.ne.s32.totalorder %s68, %s70
    %p74 = scmp.eq.s32.totalorder %s13, 0
    %p75 = por %p73, %p74
    %p76 = scmp.ne.s32.totalorder %s68, %s70
    %p77 = scmp.eq.s32.totalorder %s18, 1
    %p78 = por %p76, %p77
    %p79 = scmp.ne.s32.totalorder %s70, %s71
    %p80 = scmp.eq.s32.totalorder %s18, 0
    %p81 = por %p79, %p80
    %p82 = scmp.ne.s32.totalorder %s70, %s71
    %p83 = scmp.eq.s32.totalorder %s19, 1
    %p84 = por %p82, %p83
    %p86 = scmp.ne.s32.totalorder %s71, %s85
    %p87 = scmp.eq.s32.totalorder %s19, 0
    %p88 = por %p86, %p87
    %s90 = sadd.s32 %s89, 1
    %p93 = scmp.eq.s32.totalorder %s13, 1
    %p94 = scmp.ne.s32.totalorder %s89, %s91
    %p95 = scmp.eq.s32.totalorder %s13, 0
    %p96 = por %p94, %p95
    %p97 = scmp.ne.s32.totalorder %s89, %s91
    %p98 = scmp.eq.s32.totalorder %s18, 1
    %p99 = por %p97, %p98
    %p100 = scmp.ne.s32.totalorder %s91, %s92
    %p101 = scmp.eq.s32.totalorder %s18, 0
    %p102 = por %p100, %p101
    %p103 = scmp.ne.s32.totalorder %s91, %s92
    %p104 = scmp.eq.s32.totalorder %s19, 1
    %p105 = por %p103, %p104
    %p107 = scmp.ne.s32.totalorder %s92, %s106
    %p108 = scmp.eq.s32.totalorder %s19, 0
    %p109 = por %p107, %p108
    %s111 = sadd.s32 %s110, 1
    %p114 = scmp.eq.s32.totalorder %s13, 1
    %p115 = scmp.ne.s32.totalorder %s110, %s112
    %p116 = scmp.eq.s32.totalorder %s13, 0
    %p117 = por %p115, %p116
    %p118 = scmp.ne.s32.totalorder %s110, %s112
    %p119 = scmp.eq.s32.totalorder %s18, 1
    %p120 = por %p118, %p119
    %p121 = scmp.ne.s32.totalorder %s112, %s113
    %p122 = scmp.eq.s32.totalorder %s18, 0
    %p123 = por %p121, %p122
    %p124 = scmp.ne.s32.totalorder %s112, %s113
    %p125 = scmp.eq.s32.totalorder %s19, 1
    %p126 = por %p124, %p125
    %p128 = scmp.ne.s32.totalorder %s113, %s127
    %p129 = scmp.eq.s32.totalorder %s19, 0
    %p130 = por %p128, %p129
    %s132 = sadd.s32 %s131, 1
    %p135 = scmp.eq.s32.totalorder %s13, 1
    %p136 = scmp.ne.s32.totalorder %s131, %s133
    %p137 = scmp.eq.s32.totalorder %s13, 0
    %p138 = por %p136, %p137
    %p139 = scmp.ne.s32.totalorder %s131, %s133
    %p140 = scmp.eq.s32.totalorder %s18, 1
    %p141 = por %p139, %p140
    %p142 = scmp.ne.s32.totalorder %s133, %s134
    %p143 = scmp.eq.s32.totalorder %s18, 0
    %p144 = por %p142, %p143
    %p145 = scmp.ne.s32.totalorder %s133, %s134
    %p146 = scmp.eq.s32.totalorder %s19, 1
    %p147 = por %p145, %p146
    %p149 = scmp.ne.s32.totalorder %s134, %s148
    %p150 = scmp.eq.s32.totalorder %s19, 0
    %p151 = por %p149, %p150
    %s153 = sadd.s32 %s152, 1
    %p156 = scmp.eq.s32.totalorder %s13, 1
    %p157 = scmp.ne.s32.totalorder %s152, %s154
    %p158 = scmp.eq.s32.totalorder %s13, 0
    %p159 = por %p157, %p158
    %p160 = scmp.ne.s32.totalorder %s152, %s154
    %p161 = scmp.eq.s32.totalorder %s18, 1
    %p162 = por %p160, %p161
    %p163 = scmp.ne.s32.totalorder %s154, %s155
    %p164 = scmp.eq.s32.totalorder %s18, 0
    %p165 = por %p163, %p164
    %p166 = scmp.ne.s32.totalorder %s154, %s155
    %p167 = scmp.eq.s32.totalorder %s19, 1
    %p168 = por %p166, %p167
    %p170 = scmp.ne.s32.totalorder %s155, %s169
    %p171 = scmp.eq.s32.totalorder %s19, 0
    %p172 = por %p170, %p171
    %s173 = ssub.s32 %s13, %s20
    %p174 = scmp.eq.s32.totalorder %s173, 0
    %s176 = sadd.s32 %s175, 1
    %s177 = scalar_select %p174, %s175, %s176
    %p180 = pneg %p174
    %p181 = scmp.eq.s32.totalorder %s13, 1
    %p182 = por %p180, %p181
    %p183 = scmp.ne.s32.totalorder %s175, %s178
    %p184 = scmp.eq.s32.totalorder %s13, 0
    %p185 = por %p183, %p184
    %p186 = scmp.ne.s32.totalorder %s175, %s178
    %p187 = scmp.eq.s32.totalorder %s18, 1
    %p188 = por %p186, %p187
    %p189 = scmp.ne.s32.totalorder %s178, %s179
    %p190 = scmp.eq.s32.totalorder %s18, 0
    %p191 = por %p189, %p190
    %p192 = scmp.ne.s32.totalorder %s178, %s179
    %p193 = scmp.eq.s32.totalorder %s19, 1
    %p194 = por %p192, %p193
    %p196 = scmp.ne.s32.totalorder %s179, %s195
    %p197 = scmp.eq.s32.totalorder %s19, 0
    %p198 = por %p196, %p197
    %p199 = scmp.le.s32.totalorder 1, %s13
    %p200 = scmp.lt.s32.totalorder %s13, 3
    %p201 = pnand %p199, %p200
    %p202 = pneg %p201
    // Predicated region
    $region9: #{tpu_custom_call.1} parent=5 // pred_check
      _
    $region10: #{tpu_custom_call.1} parent=5 // pred_check_branch
      %204 = sbr.rel (%p201) target = $region12
    $region11: #{tpu_custom_call.1} parent=5 // pred_region
      %s205 = ssub.s32 %s13, 1
      // Predicated region
      $region13: #{tpu_custom_call.1} parent=11 // pred_check
        %p206 = pneg %p60
      $region14: #{tpu_custom_call.1} parent=11 // pred_check_branch
        %208 = sbr.rel (%p206) target = $region16
      $region15: #{tpu_custom_call.1} parent=11 // pred_region
        _
      $region16: #{tpu_custom_call.1} parent=11 // pred_fallthru
        _
      // Predicated region
      $region17: #{tpu_custom_call.1} parent=11 // pred_check
        %p209 = pneg %p81
      $region18: #{tpu_custom_call.1} parent=11 // pred_check_branch
        %211 = sbr.rel (%p209) target = $region20
      $region19: #{tpu_custom_call.1} parent=11 // pred_region
        _
      $region20: #{tpu_custom_call.1} parent=11 // pred_fallthru
        _
      // Predicated region
      $region21: #{tpu_custom_call.1} parent=11 // pred_check
        %p212 = pneg %p102
      $region22: #{tpu_custom_call.1} parent=11 // pred_check_branch
        %214 = sbr.rel (%p212) target = $region24
      $region23: #{tpu_custom_call.1} parent=11 // pred_region
        _
      $region24: #{tpu_custom_call.1} parent=11 // pred_fallthru
        _
      // Predicated region
      $region25: #{tpu_custom_call.1} parent=11 // pred_check
        %p215 = pneg %p123
      $region26: #{tpu_custom_call.1} parent=11 // pred_check_branch
        %217 = sbr.rel (%p215) target = $region28
      $region27: #{tpu_custom_call.1} parent=11 // pred_region
        _
      $region28: #{tpu_custom_call.1} parent=11 // pred_fallthru
        _
      // Predicated region
      $region29: #{tpu_custom_call.1} parent=11 // pred_check
        %p218 = pneg %p144
      $region30: #{tpu_custom_call.1} parent=11 // pred_check_branch
        %220 = sbr.rel (%p218) target = $region32
      $region31: #{tpu_custom_call.1} parent=11 // pred_region
        _
      $region32: #{tpu_custom_call.1} parent=11 // pred_fallthru
        _
      // Predicated region
      $region33: #{tpu_custom_call.1} parent=11 // pred_check
        %p221 = pneg %p165
      $region34: #{tpu_custom_call.1} parent=11 // pred_check_branch
        %223 = sbr.rel (%p221) target = $region36
      $region35: #{tpu_custom_call.1} parent=11 // pred_region
        _
      $region36: #{tpu_custom_call.1} parent=11 // pred_fallthru
        _
    $region12: #{tpu_custom_call.1} parent=5 // pred_fallthru
      _
    %p224 = scmp.lt.s32.totalorder %s13, 2
    // Predicated region
    $region37: #{tpu_custom_call.1} parent=5 // pred_check
      %p225 = pneg %p224
    $region38: #{tpu_custom_call.1} parent=5 // pred_check_branch
      %227 = sbr.rel (%p225) target = $region40
    $region39: #{tpu_custom_call.1} parent=5 // pred_region
      // Predicated region
      $region41: #{tpu_custom_call.1} parent=39 // pred_check
        %p228 = pneg %p33
      $region42: #{tpu_custom_call.1} parent=39 // pred_check_branch
        %230 = sbr.rel (%p228) target = $region44
      $region43: #{tpu_custom_call.1} parent=39 // pred_region
        %p231 = scmp.lt.s32.totalorder %s13, 1
        %s232 = scalar_select %p231, %s13, 1
        %s233 = smul.addr %s232, 4
        %s234 = smul.addr %s233, 8
        %s235 = scalar_lea.vmem %s0, %s234
      $region44: #{tpu_custom_call.1} parent=39 // pred_fallthru
        _
    $region40: #{tpu_custom_call.1} parent=5 // pred_fallthru
      _
    %p236 = scmp.le.s32.totalorder 1, %s13
    %p237 = scmp.lt.s32.totalorder %s13, 3
    %p238 = pnand %p236, %p237
    %p239 = pneg %p238
    // Predicated region
    $region45: #{tpu_custom_call.1} parent=5 // pred_check
      _
    $region46: #{tpu_custom_call.1} parent=5 // pred_check_branch
      %241 = sbr.rel (%p238) target = $region48
    $region47: #{tpu_custom_call.1} parent=5 // pred_region
      %s242 = ssub.s32 %s13, 1
      %p243 = scmp.lt.s32.totalorder %s18, 1
      %s244 = scalar_select %p243, %s18, 1
      %s245 = smul.addr %s244, 4
      %s246 = smul.addr %s245, 8
      %s247 = scalar_lea.vmem %s0, %s246
      %p248 = pneg %p39
      %p249 = pneg %p36
      %p250 = pneg %p60
      %p251 = pneg %p57
      %p252 = pneg %p81
      %p253 = pneg %p78
      %p254 = pneg %p102
      %p255 = pneg %p99
      %p256 = pneg %p123
      %p257 = pneg %p120
      %p258 = pneg %p144
      %p259 = pneg %p141
      %p260 = pneg %p165
      %p261 = pneg %p162
      %p262 = pneg %p191
      %p263 = pneg %p188
      %p264 = scmp.lt.s32.totalorder %s18, 1
      %s265 = scalar_select %p264, %s18, 1
      %s266 = smul.addr %s265, 4
      %s267 = smul.addr %s266, 8
      %s268 = scalar_lea.vmem %s7, %s267
      %p269 = scmp.lt.s32.totalorder %s18, 1
      %s270 = scalar_select %p269, %s18, 1
      %s271 = smul.addr %s270, 4
      %s272 = smul.addr %s271, 8
      %s273 = scalar_lea.vmem %s0, %s272
      %p274 = scmp.lt.s32.totalorder %s18, 1
      %s275 = scalar_select %p274, %s18, 1
      %s276 = smul.addr %s275, 4
      %s277 = smul.addr %s276, 8
      %s278 = scalar_lea.vmem %s7, %s277
      %vm280 = vcmask 130048
      %281 = vst.msk [vmem:[#allocation2] sm:$0xff] %vm280, 0.0
      %v282 = vlaneseq
      %v283 = vshrl.u32 %v282, 7
      %v284 = vadd.s32 %v283, 8
      %v285 = vadd.s32 %v283, 16
      %v286 = vadd.s32 %v283, 24
      %vm287 = vcmp.ge.s32.totalorder %v283, 5
      %vm288 = vcmp.ge.s32.totalorder %v284, 5
      %vm289 = vcmp.ge.s32.totalorder %v285, 5
      %vm290 = vcmp.ge.s32.totalorder %v286, 5
      %vm291 = vcmp.lt.s32.totalorder %v283, 0
      %v292 = vsub.s32 0, %v283
      %v293 = vsel %vm291, %v292, %v283
      %v294 = vmul.u32.u64.compose %v293, 3435973837
      %v295 = vextract.low.u32 %v294
      %v296 = vextract.high.u32 %v294
      %v297 = vshrl.u32 %v296, 2
      %v298 = vmul.u32 %v297, 5
      %v299 = vsub.s32 %v293, %v298
      %v300 = vsub.s32 0, %v299
      %v301 = vsel %vm291, %v300, %v299
      %vm302 = vcmp.lt.s32.totalorder %v284, 0
      %v303 = vsub.s32 0, %v284
      %v304 = vsel %vm302, %v303, %v284
      %v305 = vmul.u32.u64.compose %v304, 3435973837
      %v306 = vextract.low.u32 %v305
      %v307 = vextract.high.u32 %v305
      %v308 = vshrl.u32 %v307, 2
      %v309 = vmul.u32 %v308, 5
      %v310 = vsub.s32 %v304, %v309
      %v311 = vsub.s32 0, %v310
      %v312 = vsel %vm302, %v311, %v310
      %vm313 = vcmp.lt.s32.totalorder %v285, 0
      %v314 = vsub.s32 0, %v285
      %v315 = vsel %vm313, %v314, %v285
      %v316 = vmul.u32.u64.compose %v315, 3435973837
      %v317 = vextract.low.u32 %v316
      %v318 = vextract.high.u32 %v316
      %v319 = vshrl.u32 %v318, 2
      %v320 = vmul.u32 %v319, 5
      %v321 = vsub.s32 %v315, %v320
      %v322 = vsub.s32 0, %v321
      %v323 = vsel %vm313, %v322, %v321
      %vm324 = vcmp.lt.s32.totalorder %v286, 0
      %v325 = vsub.s32 0, %v286
      %v326 = vsel %vm324, %v325, %v286
      %v327 = vmul.u32.u64.compose %v326, 3435973837
      %v328 = vextract.low.u32 %v327
      %v329 = vextract.high.u32 %v327
      %v330 = vshrl.u32 %v329, 2
      %v331 = vmul.u32 %v330, 5
      %v332 = vsub.s32 %v326, %v331
      %v333 = vsub.s32 0, %v332
      %v334 = vsel %vm324, %v333, %v332
      %vm335 = vcmp.ne.s32.totalorder %v301, 0
      %vm336 = vcmp.ne.s32.totalorder %v312, 0
      %vm337 = vcmp.ne.s32.totalorder %v323, 0
      %vm338 = vcmp.ne.s32.totalorder %v334, 0
      %vm339 = vcmp.lt.s32.totalorder %v301, 0
      %vm340 = vcmp.lt.s32.totalorder %v312, 0
      %vm341 = vcmp.lt.s32.totalorder %v323, 0
      %vm342 = vcmp.lt.s32.totalorder %v334, 0
      %vm343 = vmand %vm339, %vm335
      %vm344 = vmand %vm340, %vm336
      %vm345 = vmand %vm341, %vm337
      %vm346 = vmand %vm342, %vm338
      %v347 = vadd.s32 %v301, 5
      %v348 = vadd.s32 %v312, 5
      %v349 = vadd.s32 %v323, 5
      %v350 = vadd.s32 %v334, 5
      %v351 = vsel %vm343, %v347, %v301
      %v352 = vsel %vm344, %v348, %v312
      %v353 = vsel %vm345, %v349, %v323
      %v354 = vsel %vm346, %v350, %v334
      %vm355 = vcmp.ne.s32.totalorder %v351, 0
      %vm356 = vcmp.ne.s32.totalorder %v352, 0
      %vm357 = vcmp.ne.s32.totalorder %v353, 0
      %vm358 = vcmp.ne.s32.totalorder %v354, 0
      %vm359 = vmand %vm287, %vm355
      %vm360 = vmand %vm288, %vm356
      %vm361 = vmand %vm289, %vm357
      %vm362 = vmand %vm290, %vm358
      %v363 = vld [vmem:[%s273] sm:$0xff]
      %v364 = vld [vmem:[%s273 + $0x8] sm:$0xff]
      %v365 = vld [vmem:[%s273 + $0x10] sm:$0xff]
      %v366 = vld [vmem:[%s273 + $0x18] sm:$0x1]
      %v367 = vld [vmem:[%s273 + $0x1] sm:$0xff]
      %v368 = vld [vmem:[%s273 + $0x9] sm:$0xff]
      %v369 = vld [vmem:[%s273 + $0x11] sm:$0xff]
      %v370 = vld [vmem:[%s273 + $0x19] sm:$0x1]
      %v371 = vld [vmem:[%s273 + $0x5] sm:$0xff]
      %v372 = vld [vmem:[%s273 + $0xd] sm:$0xff]
      %v373 = vld [vmem:[%s273 + $0x15] sm:$0xff]
      %v374 = vld [vmem:[%s273 + $0x1d] sm:$0x1]
      %v375 = vld [vmem:[%s273 + $0x6] sm:$0xff]
      %v376 = vld [vmem:[%s273 + $0xe] sm:$0xff]
      %v377 = vld [vmem:[%s273 + $0x16] sm:$0xff]
      %v378 = vld [vmem:[%s273 + $0x1e] sm:$0x1]
      %383 = vrot.lane.b32.xlu0 %v367, 48
      %v384 = vpop.permute.xlu0 %383
      %385 = vrot.lane.b32.xlu0 %v368, 48
      %v386 = vpop.permute.xlu0 %385
      %387 = vrot.lane.b32.xlu0 %v369, 48
      %v388 = vpop.permute.xlu0 %387
      %389 = vrot.lane.b32.xlu0 %v370, 48
      %v390 = vpop.permute.xlu0 %389
      %399 = vrot.lane.b32.xlu0 %v371, 96
      %v400 = vpop.permute.xlu0 %399
      %401 = vrot.lane.b32.xlu0 %v372, 96
      %v402 = vpop.permute.xlu0 %401
      %403 = vrot.lane.b32.xlu0 %v373, 96
      %v404 = vpop.permute.xlu0 %403
      %405 = vrot.lane.b32.xlu0 %v374, 96
      %v406 = vpop.permute.xlu0 %405
      %415 = vrot.lane.b32.xlu0 %v375, 16
      %v416 = vpop.permute.xlu0 %415
      %417 = vrot.lane.b32.xlu0 %v376, 16
      %v418 = vpop.permute.xlu0 %417
      %419 = vrot.lane.b32.xlu0 %v377, 16
      %v420 = vpop.permute.xlu0 %419
      %421 = vrot.lane.b32.xlu0 %v378, 16
      %v422 = vpop.permute.xlu0 %421
      %vm427 = vcmask 392192
      %v428 = vsel %vm427, %v363, %v384
      %v429 = vsel %vm427, %v364, %v386
      %v430 = vsel %vm427, %v365, %v388
      %v431 = vsel %vm427, %v366, %v390
      %vm432 = vcmask 785408
      %v433 = vsel %vm432, %v428, %v400
      %v434 = vsel %vm432, %v429, %v402
      %v435 = vsel %vm432, %v430, %v404
      %v436 = vsel %vm432, %v431, %v406
      %v437 = vsel %vm280, %v400, %v416
      %v438 = vsel %vm280, %v402, %v418
      %v439 = vsel %vm280, %v404, %v420
      %v440 = vsel %vm280, %v406, %v422
      %v441 = vpack.c.bf16 %v434, %v433
      %v442 = vpack.c.bf16 %v438, %v437
      %v443 = vpack.c.bf16 %v436, %v435
      %v444 = vpack.c.bf16 %v440, %v439
      %v445 = vld [vmem:[%s1] sm:$0xf]
      %v446 = vld [vmem:[%s1 + $0x4] sm:$0xf]
      %v447 = vld [vmem:[%s1 + $0x8] sm:$0xf]
      %v448 = vld [vmem:[%s1 + $0xc] sm:$0xf]
      %v449 = vld [vmem:[%s1 + $0x10] sm:$0xf]
      %v450 = vld [vmem:[%s1 + $0x14] sm:$0xf]
      %v451 = vld [vmem:[%s1 + $0x18] sm:$0xf]
      %v452 = vld [vmem:[%s1 + $0x1c] sm:$0xf]
      %v453 = vld [vmem:[%s1 + $0x20] sm:$0xf]
      %v454 = vld [vmem:[%s1 + $0x24] sm:$0xf]
      %v455 = vld [vmem:[%s1 + $0x28] sm:$0xf]
      %v456 = vld [vmem:[%s1 + $0x2c] sm:$0xf]
      %v457 = vld [vmem:[%s1 + $0x30] sm:$0xf]
      %v458 = vld [vmem:[%s1 + $0x34] sm:$0xf]
      %v459 = vld [vmem:[%s1 + $0x38] sm:$0xf]
      %v460 = vld [vmem:[%s1 + $0x3c] sm:$0xf]
      %v461 = vld [vmem:[%s1 + $0x40] sm:$0xf]
      %v462 = vld [vmem:[%s1 + $0x44] sm:$0xf]
      %v463 = vld [vmem:[%s1 + $0x48] sm:$0xf]
      %v464 = vld [vmem:[%s1 + $0x4c] sm:$0xf]
      %v465 = vld [vmem:[%s1 + $0x50] sm:$0xf]
      %v466 = vld [vmem:[%s1 + $0x54] sm:$0xf]
      %v467 = vld [vmem:[%s1 + $0x58] sm:$0xf]
      %v468 = vld [vmem:[%s1 + $0x5c] sm:$0xf]
      %v469 = vld [vmem:[%s2] sm:$0x1]
      %v471 = vlaneseq
      %v472 = vshrl.u32 %v471, 7
      %v473 = vsub.s32 0, %v472
      %v474 = vrot.slane %v469, %v473
      %v500 = vunpack.c.l.b16 %v445
      %v501 = vunpack.c.l.b16 %v446
      %v502 = vunpack.c.l.b16 %v447
      %v503 = vunpack.c.l.b16 %v448
      %v504 = vunpack.c.l.b16 %v449
      %v505 = vunpack.c.l.b16 %v450
      %v506 = vunpack.c.l.b16 %v451
      %v507 = vunpack.c.l.b16 %v452
      %v508 = vunpack.c.l.b16 %v453
      %v509 = vunpack.c.l.b16 %v454
      %v510 = vunpack.c.l.b16 %v455
      %v511 = vunpack.c.l.b16 %v456
      %v512 = vunpack.c.l.b16 %v457
      %v513 = vunpack.c.l.b16 %v458
      %v514 = vunpack.c.l.b16 %v459
      %v515 = vunpack.c.l.b16 %v460
      %v516 = vunpack.c.l.b16 %v461
      %v517 = vunpack.c.l.b16 %v462
      %v518 = vunpack.c.l.b16 %v463
      %v519 = vunpack.c.l.b16 %v464
      %v520 = vunpack.c.l.b16 %v465
      %v521 = vunpack.c.l.b16 %v466
      %v522 = vunpack.c.l.b16 %v467
      %v523 = vunpack.c.l.b16 %v468
      %v524 = vpack.c.b16 %v501, %v500
      %v525 = vpack.c.b16 %v503, %v502
      %v526 = vpack.c.b16 %v505, %v504
      %v527 = vpack.c.b16 %v507, %v506
      %v528 = vpack.c.b16 %v509, %v508
      %v529 = vpack.c.b16 %v511, %v510
      %v530 = vpack.c.b16 %v513, %v512
      %v531 = vpack.c.b16 %v515, %v514
      %v532 = vpack.c.b16 %v517, %v516
      %v533 = vpack.c.b16 %v519, %v518
      %v534 = vpack.c.b16 %v521, %v520
      %v535 = vpack.c.b16 %v523, %v522
      %vm548 = vcmask 523264
      %v550 = vsel %vm548, %v442, 0
      %v553 = vsel %vm548, %v444, 0
      %555 = vmatprep.subr.bf16.mxu0 0
      %556 = vmatpush1.bf16.msra.mxu0 %v531
      %557 = vmatprep.subr.bf16.mxu0 0
      %558 = vmatpush1.bf16.msra.mxu0 %v530
      %559 = vmatprep.subr.bf16.mxu0 0
      %560 = vmatpush1.bf16.msra.mxu0 %v529
      %561 = vmatprep.subr.bf16.mxu0 0
      %562 = vmatpush1.bf16.msra.mxu0 %v528
      %563 = vmatprep.subr.bf16.mxu0 0
      %564 = vmatpush1.bf16.msra.mxu0 %v527
      %565 = vmatprep.subr.bf16.mxu0 0
      %566 = vmatpush1.bf16.msra.mxu0 %v526
      %567 = vmatprep.subr.bf16.mxu0 0
      %568 = vmatpush1.bf16.msra.mxu0 %v525
      %569 = vmatprep.subr.bf16.mxu0 0
      %570 = vmatpush1.bf16.msra.mxu0 %v524
      %571 = vmatprep.subr.bf16.mxu0 0
      %572 = vmatpush2.bf16.msra.mxu0 0
      %573 = vmatprep.subr.bf16.mxu0 0
      %574 = vmatpush2.bf16.msra.mxu0 0
      %575 = vmatprep.subr.bf16.mxu0 0
      %576 = vmatpush2.bf16.msra.mxu0 0
      %577 = vmatprep.subr.bf16.mxu0 0
      %578 = vmatpush2.bf16.msra.mxu0 0
      %579 = vmatprep.subr.bf16.mxu0 0
      %580 = vmatpush2.bf16.msra.mxu0 %v535
      %581 = vmatprep.subr.bf16.mxu0 0
      %582 = vmatpush2.bf16.msra.mxu0 %v534
      %583 = vmatprep.subr.bf16.mxu0 0
      %584 = vmatpush2.bf16.msra.mxu0 %v533
      %585 = vmatprep.subr.bf16.mxu0 0
      %586 = vmatpush2.bf16.msra.mxu0 %v532
      %587 = vmatprep.mubr.bf16.mxu0 %v550
      %588 = vmatmul.mubr.bf16.gmra.mxu0 %v441
      %v589 = vpop.f32.mrf.mxu0
      %v590 = vadd.f32 %v474, %v589
      %v591 = vpop.f32.mrf.mxu0
      %v592 = vpop.f32.mrf.mxu0
      %v593 = vadd.f32 %v474, %v592
      %v594 = vpop.f32.mrf.mxu0
      %595 = vmatprep.mubr.bf16.mxu0 %v553
      %596 = vmatmul.mubr.bf16.gmra.mxu0 %v443
      %v597 = vpop.f32.mrf.mxu0
      %v598 = vadd.f32 %v474, %v597
      %v599 = vpop.f32.mrf.mxu0
      %v600 = vpop.f32.mrf.mxu0
      %v601 = vadd.f32 %v474, %v600
      %v602 = vpop.f32.mrf.mxu0
      %603 = vdwg.mxu0
      %v604 = vmax.f32 %v590, 0.0
      %v605 = vmax.f32 %v593, 0.0
      %v606 = vmax.f32 %v598, 0.0
      %v607 = vmax.f32 %v601, 0.0
      %v608 = vsel %vm359, 1, 0
      %v609 = vsel %vm360, 1, 0
      %v610 = vsel %vm361, 1, 0
      %v611 = vsel %vm362, 1, 0
      %vm612 = vcmp.eq.s32.totalorder %v608, 1
      %vm613 = vcmp.eq.s32.totalorder %v609, 1
      %vm614 = vcmp.eq.s32.totalorder %v610, 1
      %vm615 = vcmp.eq.s32.totalorder %v611, 1
      %v616 = vsel %vm612, %v604, 0.0
      %v617 = vsel %vm613, %v605, 0.0
      %v618 = vsel %vm614, %v606, 0.0
      %v619 = vsel %vm615, %v607, 0.0
      %620 = vst.msk [vmem:[#allocation2 + $0x8] sm:$0xff] %vm280, %v616
      %621 = vst.msk [vmem:[#allocation2 + $0x10] sm:$0xff] %vm280, %v617
      %622 = vst.msk [vmem:[#allocation2 + $0x18] sm:$0xff] %vm280, %v618
      %vm623 = vcmask 122880
      %624 = vst.msk [vmem:[#allocation2 + $0x20] sm:$0x1] %vm623, %v619
      %v625 = vld [vmem:[#allocation2 + $0x2] sm:$0xff]
      %v626 = vld [vmem:[#allocation2 + $0xa] sm:$0xff]
      %v627 = vld [vmem:[#allocation2 + $0x12] sm:$0xff]
      %v628 = vld [vmem:[#allocation2 + $0x1a] sm:$0x1]
      %v629 = vld [vmem:[#allocation2 + $0x3] sm:$0xff]
      %v630 = vld [vmem:[#allocation2 + $0xb] sm:$0xff]
      %v631 = vld [vmem:[#allocation2 + $0x13] sm:$0xff]
      %v632 = vld [vmem:[#allocation2 + $0x1b] sm:$0x1]
      %v633 = vld [vmem:[#allocation2 + $0x7] sm:$0xff]
      %v634 = vld [vmem:[#allocation2 + $0xf] sm:$0xff]
      %v635 = vld [vmem:[#allocation2 + $0x17] sm:$0xff]
      %v636 = vld [vmem:[#allocation2 + $0x1f] sm:$0x1]
      %v637 = vld [vmem:[#allocation2 + $0x8] sm:$0xff]
      %v638 = vld [vmem:[#allocation2 + $0x10] sm:$0xff]
      %v639 = vld [vmem:[#allocation2 + $0x18] sm:$0xff]
      %v640 = vld [vmem:[#allocation2 + $0x20] sm:$0x1]
      %645 = vrot.lane.b32.xlu0 %v629, 16
      %v646 = vpop.permute.xlu0 %645
      %647 = vrot.lane.b32.xlu0 %v630, 16
      %v648 = vpop.permute.xlu0 %647
      %649 = vrot.lane.b32.xlu0 %v631, 16
      %v650 = vpop.permute.xlu0 %649
      %651 = vrot.lane.b32.xlu0 %v632, 16
      %v652 = vpop.permute.xlu0 %651
      %661 = vrot.lane.b32.xlu0 %v633, 32
      %v662 = vpop.permute.xlu0 %661
      %663 = vrot.lane.b32.xlu0 %v634, 32
      %v664 = vpop.permute.xlu0 %663
      %665 = vrot.lane.b32.xlu0 %v635, 32
      %v666 = vpop.permute.xlu0 %665
      %667 = vrot.lane.b32.xlu0 %v636, 32
      %v668 = vpop.permute.xlu0 %667
      %677 = vrot.lane.b32.xlu0 %v637, 48
      %v678 = vpop.permute.xlu0 %677
      %679 = vrot.lane.b32.xlu0 %v638, 48
      %v680 = vpop.permute.xlu0 %679
      %681 = vrot.lane.b32.xlu0 %v639, 48
      %v682 = vpop.permute.xlu0 %681
      %683 = vrot.lane.b32.xlu0 %v640, 48
      %v684 = vpop.permute.xlu0 %683
      %v689 = vsel %vm280, %v625, %v646
      %v690 = vsel %vm280, %v626, %v648
      %v691 = vsel %vm280, %v627, %v650
      %v692 = vsel %vm280, %v628, %v652
      %vm693 = vcmask 261120
      %v694 = vsel %vm693, %v689, %v662
      %v695 = vsel %vm693, %v690, %v664
      %v696 = vsel %vm693, %v691, %v666
      %v697 = vsel %vm693, %v692, %v668
      %v698 = vsel %vm427, %v694, %v678
      %v699 = vsel %vm427, %v695, %v680
      %v700 = vsel %vm427, %v696, %v682
      %v701 = vsel %vm427, %v697, %v684
      %v702 = vpack.c.bf16 %v699, %v698
      %v703 = vpack.c.bf16 %v701, %v700
      %v704 = vld [vmem:[%s3] sm:$0xf]
      %v705 = vld [vmem:[%s3 + $0x4] sm:$0xf]
      %v706 = vld [vmem:[%s3 + $0x8] sm:$0xf]
      %v707 = vld [vmem:[%s3 + $0xc] sm:$0xf]
      %v708 = vld [vmem:[%s3 + $0x10] sm:$0xf]
      %v709 = vld [vmem:[%s3 + $0x14] sm:$0xf]
      %v710 = vld [vmem:[%s3 + $0x18] sm:$0xf]
      %v711 = vld [vmem:[%s3 + $0x1c] sm:$0xf]
      %v712 = vld [vmem:[%s4] sm:$0x1]
      %v714 = vlaneseq
      %v715 = vshrl.u32 %v714, 7
      %v716 = vsub.s32 0, %v715
      %v717 = vrot.slane %v712, %v716
      %v727 = vunpack.c.l.b16 %v704
      %v728 = vunpack.c.l.b16 %v705
      %v729 = vunpack.c.l.b16 %v706
      %v730 = vunpack.c.l.b16 %v707
      %v731 = vunpack.c.l.b16 %v708
      %v732 = vunpack.c.l.b16 %v709
      %v733 = vunpack.c.l.b16 %v710
      %v734 = vunpack.c.l.b16 %v711
      %v735 = vpack.c.b16 %v728, %v727
      %v736 = vpack.c.b16 %v730, %v729
      %v737 = vpack.c.b16 %v732, %v731
      %v738 = vpack.c.b16 %v734, %v733
      %v744 = vsel %vm548, %v702, 0
      %v747 = vsel %vm548, %v703, 0
      %749 = vmatprep.subr.bf16.mxu0 0
      %750 = vmatpush1.bf16.msra.mxu0 0
      %751 = vmatprep.subr.bf16.mxu0 0
      %752 = vmatpush1.bf16.msra.mxu0 0
      %753 = vmatprep.subr.bf16.mxu0 0
      %754 = vmatpush1.bf16.msra.mxu0 0
      %755 = vmatprep.subr.bf16.mxu0 0
      %756 = vmatpush1.bf16.msra.mxu0 0
      %757 = vmatprep.subr.bf16.mxu0 0
      %758 = vmatpush1.bf16.msra.mxu0 %v738
      %759 = vmatprep.subr.bf16.mxu0 0
      %760 = vmatpush1.bf16.msra.mxu0 %v737
      %761 = vmatprep.subr.bf16.mxu0 0
      %762 = vmatpush1.bf16.msra.mxu0 %v736
      %763 = vmatprep.subr.bf16.mxu0 0
      %764 = vmatpush1.bf16.msra.mxu0 %v735
      %765 = vmatprep.subr.bf16.mxu0 0
      %766 = vmatpush2.bf16.msra.mxu0 0
      %767 = vmatprep.subr.bf16.mxu0 0
      %768 = vmatpush2.bf16.msra.mxu0 0
      %769 = vmatprep.subr.bf16.mxu0 0
      %770 = vmatpush2.bf16.msra.mxu0 0
      %771 = vmatprep.subr.bf16.mxu0 0
      %772 = vmatpush2.bf16.msra.mxu0 0
      %773 = vmatprep.subr.bf16.mxu0 0
      %774 = vmatpush2.bf16.msra.mxu0 0
      %775 = vmatprep.subr.bf16.mxu0 0
      %776 = vmatpush2.bf16.msra.mxu0 0
      %777 = vmatprep.subr.bf16.mxu0 0
      %778 = vmatpush2.bf16.msra.mxu0 0
      %779 = vmatprep.subr.bf16.mxu0 0
      %780 = vmatpush2.bf16.msra.mxu0 0
      %781 = vmatprep.mubr.bf16.mxu0 0
      %782 = vmatmul.mubr.bf16.gmra.mxu0 %v744
      %v783 = vpop.f32.mrf.mxu0
      %v784 = vadd.f32 %v717, %v783
      %v785 = vpop.f32.mrf.mxu0
      %v786 = vpop.f32.mrf.mxu0
      %v787 = vadd.f32 %v717, %v786
      %v788 = vpop.f32.mrf.mxu0
      %789 = vmatprep.mubr.bf16.mxu0 0
      %790 = vmatmul.mubr.bf16.gmra.mxu0 %v747
      %v791 = vpop.f32.mrf.mxu0
      %v792 = vadd.f32 %v717, %v791
      %v793 = vpop.f32.mrf.mxu0
      %v794 = vpop.f32.mrf.mxu0
      %v795 = vadd.f32 %v717, %v794
      %v796 = vpop.f32.mrf.mxu0
      %797 = vdwg.mxu0
      %v798 = vmax.f32 %v784, 0.0
      %v799 = vmax.f32 %v787, 0.0
      %v800 = vmax.f32 %v792, 0.0
      %v801 = vmax.f32 %v795, 0.0
      %v802 = vpack.c.bf16 %v799, %v798
      %v803 = vpack.c.bf16 %v801, %v800
      %v804 = vld [vmem:[%s5] sm:$0xf]
      %v805 = vld [vmem:[%s6] sm:$0x1]
      %v807 = vlaneseq
      %v808 = vshrl.u32 %v807, 7
      %v809 = vsub.s32 0, %v808
      %v810 = vrot.slane %v805, %v809
      %vm812 = vcmask 64512
      %v814 = vsel %vm812, %v802, 0
      %v817 = vsel %vm812, %v803, 0
      %vm819 = vcmask 1043456
      %v821 = vsel %vm819, %v804, 0
      %823 = vmatprep.subr.bf16.mxu0 0
      %824 = vmatpush1.bf16.msra.mxu0 0
      %825 = vmatprep.subr.bf16.mxu0 0
      %826 = vmatpush1.bf16.msra.mxu0 0
      %827 = vmatprep.subr.bf16.mxu0 0
      %828 = vmatpush1.bf16.msra.mxu0 0
      %829 = vmatprep.subr.bf16.mxu0 0
      %830 = vmatpush1.bf16.msra.mxu0 0
      %831 = vmatprep.subr.bf16.mxu0 0
      %832 = vmatpush1.bf16.msra.mxu0 0
      %833 = vmatprep.subr.bf16.mxu0 0
      %834 = vmatpush1.bf16.msra.mxu0 0
      %835 = vmatprep.subr.bf16.mxu0 0
      %836 = vmatpush1.bf16.msra.mxu0 0
      %837 = vmatprep.subr.bf16.mxu0 0
      %838 = vmatpush1.bf16.msra.mxu0 %v821
      %839 = vmatprep.subr.bf16.mxu0 0
      %840 = vmatpush2.bf16.msra.mxu0 0
      %841 = vmatprep.subr.bf16.mxu0 0
      %842 = vmatpush2.bf16.msra.mxu0 0
      %843 = vmatprep.subr.bf16.mxu0 0
      %844 = vmatpush2.bf16.msra.mxu0 0
      %845 = vmatprep.subr.bf16.mxu0 0
      %846 = vmatpush2.bf16.msra.mxu0 0
      %847 = vmatprep.subr.bf16.mxu0 0
      %848 = vmatpush2.bf16.msra.mxu0 0
      %849 = vmatprep.subr.bf16.mxu0 0
      %850 = vmatpush2.bf16.msra.mxu0 0
      %851 = vmatprep.subr.bf16.mxu0 0
      %852 = vmatpush2.bf16.msra.mxu0 0
      %853 = vmatprep.subr.bf16.mxu0 0
      %854 = vmatpush2.bf16.msra.mxu0 0
      %855 = vmatprep.mubr.bf16.mxu0 0
      %856 = vmatmul.mubr.bf16.gmra.mxu0 %v814
      %v857 = vpop.f32.mrf.mxu0
      %v858 = vadd.f32 %v810, %v857
      %v859 = vpop.f32.mrf.mxu0
      %v860 = vpop.f32.mrf.mxu0
      %v861 = vadd.f32 %v810, %v860
      %v862 = vpop.f32.mrf.mxu0
      %863 = vmatprep.mubr.bf16.mxu0 0
      %864 = vmatmul.mubr.bf16.gmra.mxu0 %v817
      %v865 = vpop.f32.mrf.mxu0
      %v866 = vadd.f32 %v810, %v865
      %v867 = vpop.f32.mrf.mxu0
      %v868 = vpop.f32.mrf.mxu0
      %v869 = vadd.f32 %v810, %v868
      %v870 = vpop.f32.mrf.mxu0
      %871 = vdwg.mxu0
      %872 = vst.msk [vmem:[%s278] sm:$0xff] %vm693, %v858
      %873 = vst.msk [vmem:[%s278 + $0x8] sm:$0xff] %vm693, %v861
      %874 = vst.msk [vmem:[%s278 + $0x10] sm:$0xff] %vm693, %v866
      %vm875 = vcmask 253952
      %876 = vst.msk [vmem:[%s278 + $0x18] sm:$0x1] %vm875, %v869
      %p877 = scmp.lt.s32.totalorder %s18, 1
      %s878 = scalar_select %p877, %s18, 1
      %s879 = smul.addr %s878, 4
      %s880 = smul.addr %s879, 8
      %s881 = scalar_lea.vmem %s7, %s880
      // Predicated region
      $region49: #{tpu_custom_call.1} parent=47 // pred_check
        %p882 = pneg %p188
      $region50: #{tpu_custom_call.1} parent=47 // pred_check_branch
        %884 = sbr.rel (%p882) target = $region52
      $region51: #{tpu_custom_call.1} parent=47 // pred_region
        _
      $region52: #{tpu_custom_call.1} parent=47 // pred_fallthru
        _
    $region48: #{tpu_custom_call.1} parent=5 // pred_fallthru
      _
    %p885 = scmp.le.s32.totalorder 2, %s13
    // Predicated region
    $region53: #{tpu_custom_call.1} parent=5 // pred_check
      %p886 = pneg %p885
    $region54: #{tpu_custom_call.1} parent=5 // pred_check_branch
      %888 = sbr.rel (%p886) target = $region56
    $region55: #{tpu_custom_call.1} parent=5 // pred_region
      %s889 = ssub.s32 %s13, 2
      // Predicated region
      $region57: #{tpu_custom_call.1} parent=55 // pred_check
        %p890 = pneg %p194
      $region58: #{tpu_custom_call.1} parent=55 // pred_check_branch
        %892 = sbr.rel (%p890) target = $region60
      $region59: #{tpu_custom_call.1} parent=55 // pred_region
        %p893 = scmp.lt.s32.totalorder %s19, 1
        %s894 = scalar_select %p893, %s19, 1
        %s895 = smul.addr %s894, 4
        %s896 = smul.addr %s895, 8
        %s897 = scalar_lea.vmem %s7, %s896
      $region60: #{tpu_custom_call.1} parent=55 // pred_fallthru
        _
    $region56: #{tpu_custom_call.1} parent=5 // pred_fallthru
      _
  $region6: #{tpu_custom_call.1} parent=0 // loop_footer
    %s17 = sadd.s32 1, %s13
  $region7: #{tpu_custom_call.1} parent=0 // loop_footer_branch
    %12 = sbr.rel target = $region3
  $region8: #{tpu_custom_call.1} parent=0 // loop_exit
    _

</llo_original>
